<compile_context>
chip_gen: v7x
topology: tpu7x:2x2x1
jax: 0.10.0
libtpu: 0.0.40
codegen_flags: <defaults>
</compile_context>

<pallas_src>
import functools

import jax
import jax.numpy as jnp
from jax.experimental import pallas as pl
from jax.experimental.pallas import tpu as pltpu


def _round_up(n, m):
    return ((n + m - 1) // m) * m


def _pick_te(E, te_max):
    """Largest multiple of 128 <= te_max dividing E; else E (no E tiling)."""
    if E <= te_max:
        return E
    te = (te_max // 128) * 128
    while te >= 128:
        if E % te == 0:
            return te
        te -= 128
    return E


# ---------------------------------------------------------------------------
# Fused kernel: up-projections + SwiGLU gate + E-tiled down projection.
# Grid = (M tiles, E tiles); E is the accumulation ("arbitrary") axis.
# ---------------------------------------------------------------------------
def _swiglu_kernel(*refs, x_offset, y_offset, has_res):
    if has_res:
        (x_ref, w1_ref, b1_ref, w2_ref, b2_ref, wd_ref, bd_ref, res_ref,
         y_ref, gate_ref, acc_ref) = refs
    else:
        (x_ref, w1_ref, b1_ref, w2_ref, b2_ref, wd_ref, bd_ref,
         y_ref, gate_ref, acc_ref) = refs
        res_ref = None

    e = pl.program_id(1)
    x = x_ref[...]

    # Up projections on the MXU, operands in their stored dtype.
    h1 = jnp.dot(x, w1_ref[...], preferred_element_type=jnp.float32) + b1_ref[...]
    h2 = jnp.dot(x, w2_ref[...], preferred_element_type=jnp.float32) + b2_ref[...]

    # SwiGLU gate epilogue in f32; offsets are static (elided when 0.0).
    a = h1 - x_offset if x_offset != 0.0 else h1
    act = a * jax.nn.sigmoid(a)                     # SiLU (sigmoid -> EUP slot)
    if y_offset != 0.0:
        act = act - y_offset
    gated = act * h2
    if res_ref is not None:
        gated = gated + res_ref[...].astype(jnp.float32)
    gate_ref[...] = gated.astype(gate_ref.dtype)

    # Partial down projection for this E chunk; accumulate in f32 scratch.
    y_part = jnp.dot(gated.astype(wd_ref.dtype), wd_ref[...],
                     preferred_element_type=jnp.float32)

    @pl.when(e == 0)
    def _():
        acc_ref[...] = y_part

    @pl.when(e != 0)
    def _():
        acc_ref[...] += y_part

    @pl.when(e == pl.num_programs(1) - 1)
    def _():
        y_ref[...] = (acc_ref[...] + bd_ref[...]).astype(y_ref.dtype)


# ---------------------------------------------------------------------------
# One-time parameter prep (hoisted out of the forward path).
# ---------------------------------------------------------------------------
def prepare_swiglu_params(raw, *, compute_dtype=None):
    """Pre-sums the down projection over its n_projs column chunks
    (sum_p(g @ Wd[:, pC:(p+1)C] + bd[pC:(p+1)C]) == g @ Wd_sum + bd_sum),
    reshapes / f32-casts biases, and optionally casts weights (e.g. bf16
    for v6e/v7x MXU rate)."""
    w1, b1, w2, b2, wd, bd = (raw["w1"], raw["b1"], raw["w2"], raw["b2"],
                              raw["wd"], raw["bd"])
    n_projs = raw["n_projs"]
    C, E = w1.shape
    wd_sum = wd.reshape(E, n_projs, C).sum(axis=1)
    bd_sum = bd.reshape(n_projs, C).sum(axis=0)
    if compute_dtype is not None:
        w1 = w1.astype(compute_dtype)
        w2 = w2.astype(compute_dtype)
        wd_sum = wd_sum.astype(compute_dtype)
    return {
        "w1": w1, "b1": b1.reshape(1, E).astype(jnp.float32),
        "w2": w2, "b2": b2.reshape(1, E).astype(jnp.float32),
        "wd": wd_sum, "bd": bd_sum.reshape(1, C).astype(jnp.float32),
    }


# ---------------------------------------------------------------------------
# Forward wrapper
# ---------------------------------------------------------------------------
def swiglu_forward(x, prep, *, mlp_res=None, x_offset=0.0, y_offset=0.0,
                   tm=256, te_max=512):
    """x: (B, T, n_embd). Returns (y, mlp_res) like the torch module.
    x_offset / y_offset are static floats (default-config buffers).
    # TODO(synk): learned (traced) activation offsets would need to be passed
    # as SMEM scalars instead of static floats.
    """
    B, T, C = x.shape
    w1, b1, w2, b2, wd, bd = (prep["w1"], prep["b1"], prep["w2"], prep["b2"],
                              prep["wd"], prep["bd"])
    E = w1.shape[1]
    M = B * T
    x2 = x.reshape(M, C)

    # M tile: MXU-filling, >=2 grid steps when possible (2-TC v7x sharding),
    # respect per-dtype sublane minimum for tiny M.
    sub = {4: 8, 2: 16, 1: 32}.get(jnp.dtype(x.dtype).itemsize, 8)
    if M >= tm:
        tm_eff = tm
    elif M > 128:
        tm_eff = 128
    else:
        tm_eff = min(tm, _round_up(max(M, sub), sub))

    te = _pick_te(E, te_max)
    grid_m = pl.cdiv(M, tm_eff)        # ragged last block: writes are masked
    grid_e = pl.cdiv(E, te)

    has_res = mlp_res is not None

    in_specs = [
        pl.BlockSpec((tm_eff, C), lambda i, e: (i, 0),
                     pipeline_mode=pl.Buffered(1)),        # x (const along e)
        pl.BlockSpec((C, te), lambda i, e: (0, e)),        # W1 chunk
        pl.BlockSpec((1, te), lambda i, e: (0, e)),        # b1 chunk
        pl.BlockSpec((C, te), lambda i, e: (0, e)),        # W2 chunk
        pl.BlockSpec((1, te), lambda i, e: (0, e)),        # b2 chunk
        pl.BlockSpec((te, C), lambda i, e: (e, 0)),        # Wd chunk (pre-summed)
        pl.BlockSpec((1, C), lambda i, e: (0, 0),
                     pipeline_mode=pl.Buffered(1)),        # bd (pre-summed, const)
    ]
    args = [x2, w1, b1, w2, b2, wd, bd]
    if has_res:
        in_specs.append(pl.BlockSpec((tm_eff, te), lambda i, e: (i, e)))
        args.append(mlp_res.reshape(M, E))

    out_specs = (
        pl.BlockSpec((tm_eff, C), lambda i, e: (i, 0)),    # y (resident over e)
        pl.BlockSpec((tm_eff, te), lambda i, e: (i, e)),   # gated / mlp_res
    )
    out_shape = (
        jax.ShapeDtypeStruct((M, C), x.dtype),
        jax.ShapeDtypeStruct((M, E), x.dtype),
    )

    # VMEM budget -> explicit scoped limit (default 16/32 MiB would reject
    # production widths even when physical VMEM could hold the tiles).
    x_item = jnp.dtype(x.dtype).itemsize
    w_item = jnp.dtype(w1.dtype).itemsize
    need = (tm_eff * C * x_item * 1          # x tile (Buffered(1))
            + 2 * C * te * w_item * 2        # W1, W2 chunks (double-buffered)
            + 2 * te * 4 * 2                 # b1, b2 chunks
            + te * C * w_item * 2            # Wd chunk
            + C * 4 * 1                      # bd (Buffered(1))
            + tm_eff * C * x_item * 2        # y output block
            + tm_eff * te * x_item * 2       # gate output block
            + tm_eff * C * 4)                # f32 accumulator scratch
    if has_res:
        need += tm_eff * te * jnp.dtype(mlp_res.dtype).itemsize * 2
    vmem_limit = int(min(max(2 * need, 32 * 1024 * 1024), 100 * 1024 * 1024))

    cost = pl.CostEstimate(
        flops=6 * M * C * E,                 # 2 up-proj + 1 down-proj matmuls
        transcendentals=M * E,               # sigmoid
        bytes_accessed=(x_item * M * C
                        + grid_m * w_item * 3 * C * E
                        + x_item * (M * E + M * C)
                        + 4 * (2 * E + C)),
    )

    kernel = functools.partial(_swiglu_kernel,
                               x_offset=float(x_offset),
                               y_offset=float(y_offset),
                               has_res=has_res)

    y2, gated = pl.pallas_call(
        kernel,
        out_shape=out_shape,
        grid=(grid_m, grid_e),
        in_specs=in_specs,
        out_specs=out_specs,
        scratch_shapes=[pltpu.VMEM((tm_eff, C), jnp.float32)],
        compiler_params=pltpu.CompilerParams(
            dimension_semantics=("parallel", "arbitrary"),
            vmem_limit_bytes=vmem_limit),
        cost_estimate=cost,
    )(*args)

    # dropout p=0.0 -> identity (eval semantics).
    return y2.reshape(B, T, C), gated.reshape(B, T, E)


# ---------------------------------------------------------------------------
# Pure-JAX reference (mirrors the torch forward) for validation.
# ---------------------------------------------------------------------------
def swiglu_reference(x, raw, mlp_res=None):
    w1, b1, w2, b2, wd, bd = (raw["w1"], raw["b1"], raw["w2"], raw["b2"],
                              raw["wd"], raw["bd"])
    x_off = raw["x_offset"]
    y_off = raw["y_offset"]
    n_projs = raw["n_projs"]
    h1 = x @ w1 + b1
    h2 = x @ w2 + b2
    a = h1 - x_off
    gate = a * jax.nn.sigmoid(a) - y_off
    x_out = gate * h2
    if mlp_res is not None:
        x_out = x_out + mlp_res
    y = x_out @ wd + bd
    B, T, _ = y.shape
    y = y.reshape(B, T, n_projs, -1).sum(axis=2)
    return y, x_out


if __name__ == "__main__":
    # Small TPU-tile-friendly config: n_embd=128, mlp_size=256, 2 down projs.
    B, T, C, E = 2, 8, 128, 256
    N_PROJS = 2

    key = jax.random.PRNGKey(0)
    k_x, k_w1, k_b1, k_w2, k_b2, k_wd, k_bd, k_r, k_x2 = jax.random.split(key, 9)

    x = jax.random.normal(k_x, (B, T, C), dtype=jnp.float32)
    raw = {
        "w1": jax.random.normal(k_w1, (C, E), dtype=jnp.float32) * 0.02,
        "b1": jax.random.normal(k_b1, (E,), dtype=jnp.float32) * 0.02,
        "w2": jax.random.normal(k_w2, (C, E), dtype=jnp.float32) * 0.02,
        "b2": jax.random.normal(k_b2, (E,), dtype=jnp.float32) * 0.02,
        "wd": jax.random.normal(k_wd, (E, C * N_PROJS), dtype=jnp.float32) * 0.02,
        "bd": jax.random.normal(k_bd, (C * N_PROJS,), dtype=jnp.float32) * 0.02,
        "x_offset": 0.0,     # config.mlp_x_offset (buffer, default 0.0)
        "y_offset": 0.0,     # config.mlp_y_offset (buffer, default 0.0)
        "n_projs": N_PROJS,
    }
    prep = prepare_swiglu_params(raw)   # one-time weight prep (hoisted)

    # --- default path: mlp_res=None, te=128 -> exercises the E accumulation --
    y, mlp_res_out = swiglu_forward(x, prep, te_max=128)
    jax.block_until_ready(y)
    jax.block_until_ready(mlp_res_out)
    y_ref, res_ref = swiglu_reference(x, raw)
    assert jnp.allclose(y, y_ref, atol=1e-4, rtol=1e-4), "down output mismatch"
    assert jnp.allclose(mlp_res_out, res_ref, atol=1e-4, rtol=1e-4), \
        "residual mismatch"

    # --- explicit residual path (single E step, te = E) ----------------------
    res_in = jax.random.normal(k_r, (B, T, E), dtype=jnp.float32)
    y_r, mlp_res_r = swiglu_forward(x, prep, mlp_res=res_in)
    jax.block_until_ready(y_r)
    y_r_ref, res_r_ref = swiglu_reference(x, raw, mlp_res=res_in)
    assert jnp.allclose(y_r, y_r_ref, atol=1e-4, rtol=1e-4), \
        "down output mismatch (residual path)"
    assert jnp.allclose(mlp_res_r, res_r_ref, atol=1e-4, rtol=1e-4), \
        "residual mismatch (residual path)"

    # --- non-tile-multiple token count: ragged last M block, no jnp.pad ------
    T2 = 200  # M = 400 -> grid_m = 2 with tm=256, last block 144 rows (masked)
    x_big = jax.random.normal(k_x2, (B, T2, C), dtype=jnp.float32)
    y_b, res_b = swiglu_forward(x_big, prep, te_max=128)
    jax.block_until_ready(y_b)
    y_b_ref, res_b_ref = swiglu_reference(x_big, raw)
    assert jnp.allclose(y_b, y_b_ref, atol=1e-4, rtol=1e-4), \
        "down output mismatch (ragged path)"
    assert jnp.allclose(res_b, res_b_ref, atol=1e-4, rtol=1e-4), \
        "residual mismatch (ragged path)"

    # TODO(synk): fake_quantize_act paths and nn.Dropout(p>0) are disabled in
    # the default config and are not implemented in-kernel.
    print("KERNEL_OK")
</pallas_src>

<mosaic_0001>
module attributes {stable_mosaic.version = 11 : i64} {
  func.func @_swiglu_kernel(%arg0: i32, %arg1: i32, %arg2: memref<16x128xf32, #tpu.memory_space<vmem>>, %arg3: memref<128x128xf32, #tpu.memory_space<vmem>>, %arg4: memref<1x128xf32, #tpu.memory_space<vmem>>, %arg5: memref<128x128xf32, #tpu.memory_space<vmem>>, %arg6: memref<1x128xf32, #tpu.memory_space<vmem>>, %arg7: memref<128x128xf32, #tpu.memory_space<vmem>>, %arg8: memref<1x128xf32, #tpu.memory_space<vmem>>, %arg9: memref<16x128xf32, #tpu.memory_space<vmem>>, %arg10: memref<16x128xf32, #tpu.memory_space<vmem>>, %arg11: memref<16x128xf32, #tpu.memory_space<vmem>>) attributes {dimension_semantics = [#tpu.dimension_semantics<parallel>, #tpu.dimension_semantics<arbitrary>], iteration_bounds = array<i64: 1, 2>, scalar_prefetch = 0 : i64, scratch_operands = 1 : i64, tpu.core_type = #tpu.core_type<tc>, window_params = [{pipeline_mode = #tpu.pipeline_mode<synchronous>, transform_indices = @transform_0, window_bounds = array<i64: 16, 128>}, {transform_indices = @transform_1, window_bounds = array<i64: 128, 128>}, {transform_indices = @transform_2, window_bounds = array<i64: 1, 128>}, {transform_indices = @transform_3, window_bounds = array<i64: 128, 128>}, {transform_indices = @transform_4, window_bounds = array<i64: 1, 128>}, {transform_indices = @transform_5, window_bounds = array<i64: 128, 128>}, {pipeline_mode = #tpu.pipeline_mode<synchronous>, transform_indices = @transform_6, window_bounds = array<i64: 1, 128>}, {transform_indices = @transform_7, window_bounds = array<i64: 16, 128>}, {transform_indices = @transform_8, window_bounds = array<i64: 16, 128>}]} {
    %c0 = arith.constant 0 : index
    %c0_0 = arith.constant 0 : index
    %0 = vector.load %arg2[%c0, %c0_0] : memref<16x128xf32, #tpu.memory_space<vmem>>, vector<16x128xf32>
    %c0_1 = arith.constant 0 : index
    %c0_2 = arith.constant 0 : index
    %1 = vector.load %arg3[%c0_1, %c0_2] : memref<128x128xf32, #tpu.memory_space<vmem>>, vector<128x128xf32>
    %cst = arith.constant dense<0.000000e+00> : vector<16x128xf32>
    %2 = tpu.matmul %0, %1, %cst {dimension_numbers = #tpu.dot_dimension_numbers<[1], [0], [0], [1], [0, 0, 1, 1], [], []>} : vector<16x128xf32>, vector<128x128xf32>, vector<16x128xf32> -> vector<16x128xf32>
    %c0_3 = arith.constant 0 : index
    %c0_4 = arith.constant 0 : index
    %3 = vector.load %arg4[%c0_3, %c0_4] : memref<1x128xf32, #tpu.memory_space<vmem>>, vector<1x128xf32>
    %4 = vector.broadcast %3 : vector<1x128xf32> to vector<16x128xf32>
    %5 = arith.addf %2, %4 : vector<16x128xf32>
    %c0_5 = arith.constant 0 : index
    %c0_6 = arith.constant 0 : index
    %6 = vector.load %arg5[%c0_5, %c0_6] : memref<128x128xf32, #tpu.memory_space<vmem>>, vector<128x128xf32>
    %cst_7 = arith.constant dense<0.000000e+00> : vector<16x128xf32>
    %7 = tpu.matmul %0, %6, %cst_7 {dimension_numbers = #tpu.dot_dimension_numbers<[1], [0], [0], [1], [0, 0, 1, 1], [], []>} : vector<16x128xf32>, vector<128x128xf32>, vector<16x128xf32> -> vector<16x128xf32>
    %c0_8 = arith.constant 0 : index
    %c0_9 = arith.constant 0 : index
    %8 = vector.load %arg6[%c0_8, %c0_9] : memref<1x128xf32, #tpu.memory_space<vmem>>, vector<1x128xf32>
    %9 = vector.broadcast %8 : vector<1x128xf32> to vector<16x128xf32>
    %10 = arith.addf %7, %9 : vector<16x128xf32>
    %11 = arith.negf %5 : vector<16x128xf32>
    %12 = math.exp %11 : vector<16x128xf32>
    %cst_10 = arith.constant 1.000000e+00 : f32
    %13 = vector.broadcast %cst_10 : f32 to vector<16x128xf32>
    %14 = arith.addf %13, %12 : vector<16x128xf32>
    %15 = arith.divf %13, %14 : vector<16x128xf32>
    %16 = arith.mulf %5, %15 : vector<16x128xf32>
    %17 = arith.mulf %16, %10 : vector<16x128xf32>
    %c0_11 = arith.constant 0 : index
    %c0_12 = arith.constant 0 : index
    %18 = vector.load %arg10[%c0_11, %c0_12] : memref<16x128xf32, #tpu.memory_space<vmem>>, vector<16x128xf32>
    tpu.vector_store %arg10[%c0_11, %c0_12], %17 {strides = array<i32>} : memref<16x128xf32, #tpu.memory_space<vmem>>, vector<16x128xf32>,
    %c0_13 = arith.constant 0 : index
    %c0_14 = arith.constant 0 : index
    %19 = vector.load %arg7[%c0_13, %c0_14] : memref<128x128xf32, #tpu.memory_space<vmem>>, vector<128x128xf32>
    %cst_15 = arith.constant dense<0.000000e+00> : vector<16x128xf32>
    %20 = tpu.matmul %17, %19, %cst_15 {dimension_numbers = #tpu.dot_dimension_numbers<[1], [0], [0], [1], [0, 0, 1, 1], [], []>} : vector<16x128xf32>, vector<128x128xf32>, vector<16x128xf32> -> vector<16x128xf32>
    %c0_i32 = arith.constant 0 : i32
    %21 = arith.cmpi eq, %arg1, %c0_i32 : i32
    %22 = arith.extui %21 : i1 to i32
    %c0_i32_16 = arith.constant 0 : i32
    %23 = arith.cmpi ne, %22, %c0_i32_16 : i32
    scf.if %23 {
      %c0_20 = arith.constant 0 : index
      %c0_21 = arith.constant 0 : index
      %30 = vector.load %arg11[%c0_20, %c0_21] : memref<16x128xf32, #tpu.memory_space<vmem>>, vector<16x128xf32>
      tpu.vector_store %arg11[%c0_20, %c0_21], %20 {strides = array<i32>} : memref<16x128xf32, #tpu.memory_space<vmem>>, vector<16x128xf32>,
    } else {
    }
    %c0_i32_17 = arith.constant 0 : i32
    %24 = arith.cmpi ne, %arg1, %c0_i32_17 : i32
    %25 = arith.extui %24 : i1 to i32
    %c0_i32_18 = arith.constant 0 : i32
    %26 = arith.cmpi ne, %25, %c0_i32_18 : i32
    scf.if %26 {
      %c0_20 = arith.constant 0 : index
      %c0_21 = arith.constant 0 : index
      %30 = vector.load %arg11[%c0_20, %c0_21] : memref<16x128xf32, #tpu.memory_space<vmem>>, vector<16x128xf32>
      %31 = arith.addf %30, %20 : vector<16x128xf32>
      %c0_22 = arith.constant 0 : index
      %c0_23 = arith.constant 0 : index
      %32 = vector.load %arg11[%c0_22, %c0_23] : memref<16x128xf32, #tpu.memory_space<vmem>>, vector<16x128xf32>
      tpu.vector_store %arg11[%c0_22, %c0_23], %31 {strides = array<i32>} : memref<16x128xf32, #tpu.memory_space<vmem>>, vector<16x128xf32>,
    } else {
    }
    %c1_i32 = arith.constant 1 : i32
    %27 = arith.cmpi eq, %arg1, %c1_i32 : i32
    %28 = arith.extui %27 : i1 to i32
    %c0_i32_19 = arith.constant 0 : i32
    %29 = arith.cmpi ne, %28, %c0_i32_19 : i32
    scf.if %29 {
      %c0_20 = arith.constant 0 : index
      %c0_21 = arith.constant 0 : index
      %30 = vector.load %arg11[%c0_20, %c0_21] : memref<16x128xf32, #tpu.memory_space<vmem>>, vector<16x128xf32>
      %c0_22 = arith.constant 0 : index
      %c0_23 = arith.constant 0 : index
      %31 = vector.load %arg8[%c0_22, %c0_23] : memref<1x128xf32, #tpu.memory_space<vmem>>, vector<1x128xf32>
      %32 = vector.broadcast %31 : vector<1x128xf32> to vector<16x128xf32>
      %33 = arith.addf %30, %32 : vector<16x128xf32>
      %c0_24 = arith.constant 0 : index
      %c0_25 = arith.constant 0 : index
      %34 = vector.load %arg9[%c0_24, %c0_25] : memref<16x128xf32, #tpu.memory_space<vmem>>, vector<16x128xf32>
      tpu.vector_store %arg9[%c0_24, %c0_25], %33 {strides = array<i32>} : memref<16x128xf32, #tpu.memory_space<vmem>>, vector<16x128xf32>,
    } else {
    }
    return
  }
  func.func @transform_0(%arg0: i32, %arg1: i32) -> (i32, i32) {
    %c0_i32 = arith.constant 0 : i32
    %c0_i32_0 = arith.constant 0 : i32
    return %arg0, %c0_i32 : i32, i32
  }
  func.func @transform_1(%arg0: i32, %arg1: i32) -> (i32, i32) {
    %c0_i32 = arith.constant 0 : i32
    %c0_i32_0 = arith.constant 0 : i32
    return %c0_i32, %arg1 : i32, i32
  }
  func.func @transform_2(%arg0: i32, %arg1: i32) -> (i32, i32) {
    %c0_i32 = arith.constant 0 : i32
    %c0_i32_0 = arith.constant 0 : i32
    return %c0_i32, %arg1 : i32, i32
  }
  func.func @transform_3(%arg0: i32, %arg1: i32) -> (i32, i32) {
    %c0_i32 = arith.constant 0 : i32
    %c0_i32_0 = arith.constant 0 : i32
    return %c0_i32, %arg1 : i32, i32
  }
  func.func @transform_4(%arg0: i32, %arg1: i32) -> (i32, i32) {
    %c0_i32 = arith.constant 0 : i32
    %c0_i32_0 = arith.constant 0 : i32
    return %c0_i32, %arg1 : i32, i32
  }
  func.func @transform_5(%arg0: i32, %arg1: i32) -> (i32, i32) {
    %c0_i32 = arith.constant 0 : i32
    %c0_i32_0 = arith.constant 0 : i32
    return %arg1, %c0_i32 : i32, i32
  }
  func.func @transform_6(%arg0: i32, %arg1: i32) -> (i32, i32) {
    %c0_i32 = arith.constant 0 : i32
    %c0_i32_0 = arith.constant 0 : i32
    %c0_i32_1 = arith.constant 0 : i32
    return %c0_i32, %c0_i32_0 : i32, i32
  }
  func.func @transform_7(%arg0: i32, %arg1: i32) -> (i32, i32) {
    %c0_i32 = arith.constant 0 : i32
    %c0_i32_0 = arith.constant 0 : i32
    return %arg0, %c0_i32 : i32, i32
  }
  func.func @transform_8(%arg0: i32, %arg1: i32) -> (i32, i32) {
    %c0_i32 = arith.constant 0 : i32
    return %arg0, %arg1 : i32, i32
  }
}

</mosaic_0001>

<llo_original>
// kernel: tpu_custom_call.1
$region0: #{tpu_custom_call.1}
  #allocation0 [shape = 'u32[]', space=smem, size = 0x4, offset = 0x4, fixed_abs, tag = 'smem constant byte address 0x4 - core index']
  #allocation1 [shape = 'u32[144,128]{1,0:T(1,128)}', space=vmem, size = 0x12000, scoped, tag = 'internal scratch']
  #allocation2 [shape = 'f32[16,128]{1,0:T(8,128)}', space=vmem, size = 0x2000, scoped, tag = 'scratch operand']
  %s0 = inlined_call_operand.hbm [shape: f32[16,128], index: 0, kind: input, shape index: {}]
  %s1 = inlined_call_operand.hbm [shape: f32[128,256], index: 1, kind: input, shape index: {}]
  %s2 = inlined_call_operand.vmem [shape: f32[1,256], index: 2, kind: input, shape index: {}]
  %s3 = inlined_call_operand.hbm [shape: f32[128,256], index: 3, kind: input, shape index: {}]
  %s4 = inlined_call_operand.vmem [shape: f32[1,256], index: 4, kind: input, shape index: {}]
  %s5 = inlined_call_operand.hbm [shape: f32[256,128], index: 5, kind: input, shape index: {}]
  %s6 = inlined_call_operand.vmem [shape: f32[1,128], index: 6, kind: input, shape index: {}]
  %s7 = inlined_call_operand.hbm [shape: f32[16,128], index: 7, kind: output, shape index: {0}]
  %s8 = inlined_call_operand.hbm [shape: f32[16,256], index: 8, kind: output, shape index: {1}]
  %9 = xla_tuple %s7, %s8
  %s10 = sld [smem:[#allocation0]]
  $region97: #{tpu_custom_call.1} parent=0
    _
  %s12 = ssub.s32 1, %s10
  %s13 = scalar_select 0, %s12, %s10
  $region1: #{tpu_custom_call.1} parent=0
    #allocation3 [shape = 'u8[8192]{0}', space=vmem, size = 0x2000, scoped, tag = 'input window, operand 0, single buffered']
    #allocation4 [shape = 's32[2]{0}', space=sflag, size = 0x8, scoped, tag = 'scoped memory for tpu_custom_call.1']
    #allocation5 [shape = 's32[2]{0}', space=sflag, size = 0x8, scoped, tag = 'scoped memory for tpu_custom_call.1']
    #allocation6 [shape = 'u8[131072]{0}', space=vmem, size = 0x20000, scoped, tag = 'input window, operand 1']
    #allocation7 [shape = 's32[2]{0}', space=sflag, size = 0x8, scoped, tag = 'scoped memory for tpu_custom_call.1']
    #allocation8 [shape = 'u8[131072]{0}', space=vmem, size = 0x20000, scoped, tag = 'input window, operand 3']
    #allocation9 [shape = 'u8[131072]{0}', space=vmem, size = 0x20000, scoped, tag = 'input window, operand 5']
    #allocation10 [shape = 's32[2]{0}', space=sflag, size = 0x8, scoped, tag = 'scoped memory for tpu_custom_call.1']
    #allocation11 [shape = 'u8[8192]{0}', space=vmem, size = 0x2000, scoped, tag = 'output window, operand 0, single buffered']
    #allocation12 [shape = 'u8[16384]{0}', space=vmem, size = 0x4000, scoped, tag = 'output window, operand 1']
    #allocation13 [shape = 's32[2]{0}', space=sflag, size = 0x8, scoped, tag = 'scoped memory for tpu_custom_call.1']
    %14 = vsyncpa [#allocation4], 0
    %15 = vsyncpa [#allocation7], 0
    %s16 = scalar_lea.sflag [#allocation7], 1
    %17 = vsyncpa %s16, 0
    %18 = vsyncpa [#allocation10], 0
    %s19 = scalar_lea.sflag [#allocation10], 1
    %20 = vsyncpa %s19, 0
    %21 = vsyncpa [#allocation5], 0
    %22 = vsyncpa [#allocation13], 0
    %s23 = scalar_lea.sflag [#allocation13], 1
    %24 = vsyncpa %s23, 0
    loop: start=0, step=1, limit=4
    $region2: #{tpu_custom_call.1} parent=1 // loop_pre_header
      _
    $region3: #{tpu_custom_call.1} parent=1 // loop_header
      %s26 = sphi 0, %s30
      %p27 = scmp.ge.s32.totalorder %s26, 4
      %s33 = sphi 0, %s45
      %s34 = sphi 0, %s41
      %s35 = sphi 0, %s33
      %s36 = sphi 0, %s34
      %s37 = sphi 0, %s35
      %s38 = sphi 0, %s36
      %s48 = sphi 0, %s50
      %s51 = sphi 0, %s48
      %s52 = sphi 0, %s51
      %s68 = sphi 0, %s52
      %s74 = sphi 0, %s76
      %s77 = sphi 0, %s74
      %s78 = sphi 0, %s77
      %s94 = sphi 0, %s78
      %s100 = sphi 0, %s102
      %s103 = sphi 0, %s100
      %s104 = sphi 0, %s103
      %s120 = sphi 0, %s104
      %s126 = sphi 0, %s128
      %s129 = sphi 0, %s126
      %s130 = sphi 0, %s129
      %s146 = sphi 0, %s130
      %s152 = sphi 0, %s154
      %s155 = sphi 0, %s152
      %s156 = sphi 0, %s155
      %s172 = sphi 0, %s156
      %s178 = sphi 0, %s180
      %s181 = sphi 0, %s178
      %s182 = sphi 0, %s181
      %s198 = sphi 0, %s182
      %s202 = sphi 0, %s202
      %s204 = sphi 0, %s202
      %s205 = sphi 0, %s204
      %s219 = sphi 0, %s205
      %s225 = sphi 0, %s227
      %s228 = sphi 0, %s225
      %s229 = sphi 0, %s228
      %s245 = sphi 0, %s229
      %s253 = sphi 0, %s255
      %s256 = sphi 0, %s253
      %s257 = sphi 0, %s256
      %s273 = sphi 0, %s257
    $region4: #{tpu_custom_call.1} parent=1 // loop_header_branch
      %29 = sbr.rel (%p27) target = $region8
    $region5: #{tpu_custom_call.1} parent=1 // loop_body
      %s31 = ssub.s32 %s26, 1
      %s32 = ssub.s32 %s26, 2
      %s39 = sadd.s32 1, %s34
      %p40 = scmp.ge.s32.totalorder %s39, 2
      %s41 = scalar_select %p40, 0, %s39
      %s42 = sadd.s32 1, %s33
      %s43 = scalar_select %p40, %s42, %s33
      %p44 = scmp.ge.s32.totalorder %s43, 1
      %s45 = scalar_select %p44, 0, %s43
      %s46 = ssub.s32 %s33, %s45
      %p47 = scmp.eq.s32.totalorder %s46, 0
      %s49 = sadd.s32 %s48, 1
      %s50 = scalar_select %p47, %s48, %s49
      %p53 = pneg %p47
      %p54 = scmp.eq.s32.totalorder %s26, 1
      %p55 = por %p53, %p54
      %p56 = scmp.ne.s32.totalorder %s48, %s51
      %p57 = scmp.eq.s32.totalorder %s26, 0
      %p58 = por %p56, %p57
      %p59 = scmp.ne.s32.totalorder %s48, %s51
      %p60 = scmp.eq.s32.totalorder %s31, 1
      %p61 = por %p59, %p60
      %p62 = scmp.ne.s32.totalorder %s51, %s52
      %p63 = scmp.eq.s32.totalorder %s31, 0
      %p64 = por %p62, %p63
      %p65 = scmp.ne.s32.totalorder %s51, %s52
      %p66 = scmp.eq.s32.totalorder %s32, 1
      %p67 = por %p65, %p66
      %p69 = scmp.ne.s32.totalorder %s52, %s68
      %p70 = scmp.eq.s32.totalorder %s32, 0
      %p71 = por %p69, %p70
      %s72 = ssub.s32 %s34, %s41
      %p73 = scmp.eq.s32.totalorder %s72, 0
      %s75 = sadd.s32 %s74, 1
      %s76 = scalar_select %p73, %s74, %s75
      %p79 = pneg %p73
      %p80 = scmp.eq.s32.totalorder %s26, 1
      %p81 = por %p79, %p80
      %p82 = scmp.ne.s32.totalorder %s74, %s77
      %p83 = scmp.eq.s32.totalorder %s26, 0
      %p84 = por %p82, %p83
      %p85 = scmp.ne.s32.totalorder %s74, %s77
      %p86 = scmp.eq.s32.totalorder %s31, 1
      %p87 = por %p85, %p86
      %p88 = scmp.ne.s32.totalorder %s77, %s78
      %p89 = scmp.eq.s32.totalorder %s31, 0
      %p90 = por %p88, %p89
      %p91 = scmp.ne.s32.totalorder %s77, %s78
      %p92 = scmp.eq.s32.totalorder %s32, 1
      %p93 = por %p91, %p92
      %p95 = scmp.ne.s32.totalorder %s78, %s94
      %p96 = scmp.eq.s32.totalorder %s32, 0
      %p97 = por %p95, %p96
      %s98 = ssub.s32 %s34, %s41
      %p99 = scmp.eq.s32.totalorder %s98, 0
      %s101 = sadd.s32 %s100, 1
      %s102 = scalar_select %p99, %s100, %s101
      %p105 = pneg %p99
      %p106 = scmp.eq.s32.totalorder %s26, 1
      %p107 = por %p105, %p106
      %p108 = scmp.ne.s32.totalorder %s100, %s103
      %p109 = scmp.eq.s32.totalorder %s26, 0
      %p110 = por %p108, %p109
      %p111 = scmp.ne.s32.totalorder %s100, %s103
      %p112 = scmp.eq.s32.totalorder %s31, 1
      %p113 = por %p111, %p112
      %p114 = scmp.ne.s32.totalorder %s103, %s104
      %p115 = scmp.eq.s32.totalorder %s31, 0
      %p116 = por %p114, %p115
      %p117 = scmp.ne.s32.totalorder %s103, %s104
      %p118 = scmp.eq.s32.totalorder %s32, 1
      %p119 = por %p117, %p118
      %p121 = scmp.ne.s32.totalorder %s104, %s120
      %p122 = scmp.eq.s32.totalorder %s32, 0
      %p123 = por %p121, %p122
      %s124 = ssub.s32 %s34, %s41
      %p125 = scmp.eq.s32.totalorder %s124, 0
      %s127 = sadd.s32 %s126, 1
      %s128 = scalar_select %p125, %s126, %s127
      %p131 = pneg %p125
      %p132 = scmp.eq.s32.totalorder %s26, 1
      %p133 = por %p131, %p132
      %p134 = scmp.ne.s32.totalorder %s126, %s129
      %p135 = scmp.eq.s32.totalorder %s26, 0
      %p136 = por %p134, %p135
      %p137 = scmp.ne.s32.totalorder %s126, %s129
      %p138 = scmp.eq.s32.totalorder %s31, 1
      %p139 = por %p137, %p138
      %p140 = scmp.ne.s32.totalorder %s129, %s130
      %p141 = scmp.eq.s32.totalorder %s31, 0
      %p142 = por %p140, %p141
      %p143 = scmp.ne.s32.totalorder %s129, %s130
      %p144 = scmp.eq.s32.totalorder %s32, 1
      %p145 = por %p143, %p144
      %p147 = scmp.ne.s32.totalorder %s130, %s146
      %p148 = scmp.eq.s32.totalorder %s32, 0
      %p149 = por %p147, %p148
      %s150 = ssub.s32 %s34, %s41
      %p151 = scmp.eq.s32.totalorder %s150, 0
      %s153 = sadd.s32 %s152, 1
      %s154 = scalar_select %p151, %s152, %s153
      %p157 = pneg %p151
      %p158 = scmp.eq.s32.totalorder %s26, 1
      %p159 = por %p157, %p158
      %p160 = scmp.ne.s32.totalorder %s152, %s155
      %p161 = scmp.eq.s32.totalorder %s26, 0
      %p162 = por %p160, %p161
      %p163 = scmp.ne.s32.totalorder %s152, %s155
      %p164 = scmp.eq.s32.totalorder %s31, 1
      %p165 = por %p163, %p164
      %p166 = scmp.ne.s32.totalorder %s155, %s156
      %p167 = scmp.eq.s32.totalorder %s31, 0
      %p168 = por %p166, %p167
      %p169 = scmp.ne.s32.totalorder %s155, %s156
      %p170 = scmp.eq.s32.totalorder %s32, 1
      %p171 = por %p169, %p170
      %p173 = scmp.ne.s32.totalorder %s156, %s172
      %p174 = scmp.eq.s32.totalorder %s32, 0
      %p175 = por %p173, %p174
      %s176 = ssub.s32 %s34, %s41
      %p177 = scmp.eq.s32.totalorder %s176, 0
      %s179 = sadd.s32 %s178, 1
      %s180 = scalar_select %p177, %s178, %s179
      %p183 = pneg %p177
      %p184 = scmp.eq.s32.totalorder %s26, 1
      %p185 = por %p183, %p184
      %p186 = scmp.ne.s32.totalorder %s178, %s181
      %p187 = scmp.eq.s32.totalorder %s26, 0
      %p188 = por %p186, %p187
      %p189 = scmp.ne.s32.totalorder %s178, %s181
      %p190 = scmp.eq.s32.totalorder %s31, 1
      %p191 = por %p189, %p190
      %p192 = scmp.ne.s32.totalorder %s181, %s182
      %p193 = scmp.eq.s32.totalorder %s31, 0
      %p194 = por %p192, %p193
      %p195 = scmp.ne.s32.totalorder %s181, %s182
      %p196 = scmp.eq.s32.totalorder %s32, 1
      %p197 = por %p195, %p196
      %p199 = scmp.ne.s32.totalorder %s182, %s198
      %p200 = scmp.eq.s32.totalorder %s32, 0
      %p201 = por %p199, %p200
      %s203 = sadd.s32 %s202, 1
      %p206 = scmp.eq.s32.totalorder %s26, 1
      %p207 = scmp.ne.s32.totalorder %s202, %s204
      %p208 = scmp.eq.s32.totalorder %s26, 0
      %p209 = por %p207, %p208
      %p210 = scmp.ne.s32.totalorder %s202, %s204
      %p211 = scmp.eq.s32.totalorder %s31, 1
      %p212 = por %p210, %p211
      %p213 = scmp.ne.s32.totalorder %s204, %s205
      %p214 = scmp.eq.s32.totalorder %s31, 0
      %p215 = por %p213, %p214
      %p216 = scmp.ne.s32.totalorder %s204, %s205
      %p217 = scmp.eq.s32.totalorder %s32, 1
      %p218 = por %p216, %p217
      %p220 = scmp.ne.s32.totalorder %s205, %s219
      %p221 = scmp.eq.s32.totalorder %s32, 0
      %p222 = por %p220, %p221
      %s223 = ssub.s32 %s33, %s45
      %p224 = scmp.eq.s32.totalorder %s223, 0
      %s226 = sadd.s32 %s225, 1
      %s227 = scalar_select %p224, %s225, %s226
      %p230 = pneg %p224
      %p231 = scmp.eq.s32.totalorder %s26, 1
      %p232 = por %p230, %p231
      %p233 = scmp.ne.s32.totalorder %s225, %s228
      %p234 = scmp.eq.s32.totalorder %s26, 0
      %p235 = por %p233, %p234
      %p236 = scmp.ne.s32.totalorder %s225, %s228
      %p237 = scmp.eq.s32.totalorder %s31, 1
      %p238 = por %p236, %p237
      %p239 = scmp.ne.s32.totalorder %s228, %s229
      %p240 = scmp.eq.s32.totalorder %s31, 0
      %p241 = por %p239, %p240
      %p242 = scmp.ne.s32.totalorder %s228, %s229
      %p243 = scmp.eq.s32.totalorder %s32, 1
      %p244 = por %p242, %p243
      %p246 = scmp.ne.s32.totalorder %s229, %s245
      %p247 = scmp.eq.s32.totalorder %s32, 0
      %p248 = por %p246, %p247
      %s249 = ssub.s32 %s33, %s45
      %s250 = ssub.s32 %s34, %s41
      %s251 = sor.u32 %s249, %s250
      %p252 = scmp.eq.s32.totalorder %s251, 0
      %s254 = sadd.s32 %s253, 1
      %s255 = scalar_select %p252, %s253, %s254
      %p258 = pneg %p252
      %p259 = scmp.eq.s32.totalorder %s26, 1
      %p260 = por %p258, %p259
      %p261 = scmp.ne.s32.totalorder %s253, %s256
      %p262 = scmp.eq.s32.totalorder %s26, 0
      %p263 = por %p261, %p262
      %p264 = scmp.ne.s32.totalorder %s253, %s256
      %p265 = scmp.eq.s32.totalorder %s31, 1
      %p266 = por %p264, %p265
      %p267 = scmp.ne.s32.totalorder %s256, %s257
      %p268 = scmp.eq.s32.totalorder %s31, 0
      %p269 = por %p267, %p268
      %p270 = scmp.ne.s32.totalorder %s256, %s257
      %p271 = scmp.eq.s32.totalorder %s32, 1
      %p272 = por %p270, %p271
      %p274 = scmp.ne.s32.totalorder %s257, %s273
      %p275 = scmp.eq.s32.totalorder %s32, 0
      %p276 = por %p274, %p275
      %p277 = scmp.le.s32.totalorder 1, %s26
      %p278 = scmp.lt.s32.totalorder %s26, 3
      %p279 = pnand %p277, %p278
      %p280 = pneg %p279
      // Predicated region
      $region9: #{tpu_custom_call.1} parent=5 // pred_check
        _
      $region10: #{tpu_custom_call.1} parent=5 // pred_check_branch
        %282 = sbr.rel (%p279) target = $region12
      $region11: #{tpu_custom_call.1} parent=5 // pred_region
        %s283 = ssub.s32 %s26, 1
        // Predicated region
        $region13: #{tpu_custom_call.1} parent=11 // pred_check
          %p284 = pneg %p64
        $region14: #{tpu_custom_call.1} parent=11 // pred_check_branch
          %286 = sbr.rel (%p284) target = $region16
        $region15: #{tpu_custom_call.1} parent=11 // pred_region
          %s287 = smul.u32 2, %s35
          %s289 = ssub.s32 256, 256
          %290 = vsyncadd [#allocation4], %s289
          %s291 = smul.addr %s287, 128
          %s292 = scalar_lea.hbm %s0, %s291
          %s293 = sshll.u32 [#allocation3], 4
          %s294 = int_to_ptr.vmem [resolvable:$true] %s293
          %299 = dma.hbm_to_vmem [thread:$0]  %s292, 256, %s294, [#allocation4], 128, 128, 8
        $region16: #{tpu_custom_call.1} parent=11 // pred_fallthru
          _
        // Predicated region
        $region17: #{tpu_custom_call.1} parent=11 // pred_check
          %p300 = pneg %p215
        $region18: #{tpu_custom_call.1} parent=11 // pred_check_branch
          %302 = sbr.rel (%p300) target = $region20
        $region19: #{tpu_custom_call.1} parent=11 // pred_region
          _
        $region20: #{tpu_custom_call.1} parent=11 // pred_fallthru
          _
      $region12: #{tpu_custom_call.1} parent=5 // pred_fallthru
        _
      %p303 = scmp.lt.s32.totalorder %s26, 2
      // Predicated region
      $region21: #{tpu_custom_call.1} parent=5 // pred_check
        %p304 = pneg %p303
      $region22: #{tpu_custom_call.1} parent=5 // pred_check_branch
        %306 = sbr.rel (%p304) target = $region24
      $region23: #{tpu_custom_call.1} parent=5 // pred_region
        // Predicated region
        $region25: #{tpu_custom_call.1} parent=23 // pred_check
          %p307 = pneg %p84
        $region26: #{tpu_custom_call.1} parent=23 // pred_check_branch
          %309 = sbr.rel (%p307) target = $region28
        $region27: #{tpu_custom_call.1} parent=23 // pred_region
          %s310 = sand.u32 %s26, 1
          %s311 = scalar_lea.sflag [#allocation7], %s310
          %s312 = sand.u32 %s74, 1
          %s313 = smul.addr %s312, 128
          %s314 = scalar_lea.vmem [#allocation6], %s313
          %s316 = ssub.s32 2048, 2048
          %317 = vsyncadd %s311, %s316
          %s318 = smul.addr %s34, 128
          %s319 = scalar_lea.hbm %s1, %s318
          %s320 = sshll.u32 %s314, 4
          %s321 = int_to_ptr.vmem [resolvable:$true] %s320
          %326 = dma.hbm_to_vmem [thread:$0]  %s319, 2048, %s321, %s311, 256, 128, 8
        $region28: #{tpu_custom_call.1} parent=23 // pred_fallthru
          _
        // Predicated region
        $region29: #{tpu_custom_call.1} parent=23 // pred_check
          %p327 = pneg %p110
        $region30: #{tpu_custom_call.1} parent=23 // pred_check_branch
          %329 = sbr.rel (%p327) target = $region32
        $region31: #{tpu_custom_call.1} parent=23 // pred_region
          %p330 = scmp.lt.s32.totalorder %s34, 1
          %s331 = scalar_select %p330, %s34, 1
          %s332 = scalar_lea.vmem %s2, %s331
        $region32: #{tpu_custom_call.1} parent=23 // pred_fallthru
          _
        // Predicated region
        $region33: #{tpu_custom_call.1} parent=23 // pred_check
          %p333 = pneg %p136
        $region34: #{tpu_custom_call.1} parent=23 // pred_check_branch
          %335 = sbr.rel (%p333) target = $region36
        $region35: #{tpu_custom_call.1} parent=23 // pred_region
          %s336 = sand.u32 %s26, 1
          %s337 = scalar_lea.sflag [#allocation7], %s336
          %s338 = sand.u32 %s126, 1
          %s339 = smul.addr %s338, 128
          %s340 = scalar_lea.vmem [#allocation8], %s339
          %s342 = ssub.s32 2048, 2048
          %343 = vsyncadd %s337, %s342
          %s344 = smul.addr %s34, 128
          %s345 = scalar_lea.hbm %s3, %s344
          %s346 = sshll.u32 %s340, 4
          %s347 = int_to_ptr.vmem [resolvable:$true] %s346
          %352 = dma.hbm_to_vmem [thread:$0]  %s345, 2048, %s347, %s337, 256, 128, 8
        $region36: #{tpu_custom_call.1} parent=23 // pred_fallthru
          _
        // Predicated region
        $region37: #{tpu_custom_call.1} parent=23 // pred_check
          %p353 = pneg %p162
        $region38: #{tpu_custom_call.1} parent=23 // pred_check_branch
          %355 = sbr.rel (%p353) target = $region40
        $region39: #{tpu_custom_call.1} parent=23 // pred_region
          %p356 = scmp.lt.s32.totalorder %s34, 1
          %s357 = scalar_select %p356, %s34, 1
          %s358 = scalar_lea.vmem %s4, %s357
        $region40: #{tpu_custom_call.1} parent=23 // pred_fallthru
          _
        // Predicated region
        $region41: #{tpu_custom_call.1} parent=23 // pred_check
          %p359 = pneg %p188
        $region42: #{tpu_custom_call.1} parent=23 // pred_check_branch
          %361 = sbr.rel (%p359) target = $region44
        $region43: #{tpu_custom_call.1} parent=23 // pred_region
          %s362 = sand.u32 %s178, 1
          %s363 = scalar_lea.sflag [#allocation10], %s362
          %s364 = sand.u32 %s178, 1
          %s365 = smul.addr %s364, 128
          %s366 = scalar_lea.vmem [#allocation9], %s365
          %s367 = smul.u32 16, %s34
          %s369 = ssub.s32 2048, 2048
          %370 = vsyncadd %s363, %s369
          %s371 = smul.addr %s367, 128
          %s372 = scalar_lea.hbm %s5, %s371
          %s373 = sshll.u32 %s366, 4
          %s374 = int_to_ptr.vmem [resolvable:$true] %s373
          %379 = dma.hbm_to_vmem [thread:$0]  %s372, 2048, %s374, %s363, 128, 128, 8
        $region44: #{tpu_custom_call.1} parent=23 // pred_fallthru
          _
      $region24: #{tpu_custom_call.1} parent=5 // pred_fallthru
        _
      %p380 = scmp.le.s32.totalorder 1, %s26
      %p381 = scmp.lt.s32.totalorder %s26, 3
      %p382 = pnand %p380, %p381
      %p383 = pneg %p382
      // Predicated region
      $region45: #{tpu_custom_call.1} parent=5 // pred_check
        _
      $region46: #{tpu_custom_call.1} parent=5 // pred_check_branch
        %385 = sbr.rel (%p382) target = $region48
      $region47: #{tpu_custom_call.1} parent=5 // pred_region
        %s386 = ssub.s32 %s26, 1
        // Predicated region
        $region49: #{tpu_custom_call.1} parent=47 // pred_check
          %p387 = pneg %p64
        $region50: #{tpu_custom_call.1} parent=47 // pred_check_branch
          %389 = sbr.rel (%p387) target = $region52
        $region51: #{tpu_custom_call.1} parent=47 // pred_region
          %390 = dma.done [#allocation4], 256
        $region52: #{tpu_custom_call.1} parent=47 // pred_fallthru
          _
        %s391 = sand.u32 %s31, 1
        %s392 = scalar_lea.sflag [#allocation7], %s391
        %s393 = sand.u32 %s77, 1
        %s394 = smul.addr %s393, 128
        %s395 = scalar_lea.vmem [#allocation6], %s394
        // Predicated region
        $region53: #{tpu_custom_call.1} parent=47 // pred_check
          %p396 = pneg %p90
        $region54: #{tpu_custom_call.1} parent=47 // pred_check_branch
          %398 = sbr.rel (%p396) target = $region56
        $region55: #{tpu_custom_call.1} parent=47 // pred_region
          %399 = dma.done %s392, 2048
        $region56: #{tpu_custom_call.1} parent=47 // pred_fallthru
          _
        %s400 = sand.u32 %s31, 1
        %s401 = scalar_lea.sflag [#allocation7], %s400
        %s402 = sand.u32 %s129, 1
        %s403 = smul.addr %s402, 128
        %s404 = scalar_lea.vmem [#allocation8], %s403
        // Predicated region
        $region57: #{tpu_custom_call.1} parent=47 // pred_check
          %p405 = pneg %p142
        $region58: #{tpu_custom_call.1} parent=47 // pred_check_branch
          %407 = sbr.rel (%p405) target = $region60
        $region59: #{tpu_custom_call.1} parent=47 // pred_region
          %408 = dma.done %s401, 2048
        $region60: #{tpu_custom_call.1} parent=47 // pred_fallthru
          _
        %s409 = sand.u32 %s181, 1
        %s410 = scalar_lea.sflag [#allocation10], %s409
        %s411 = sand.u32 %s181, 1
        %s412 = smul.addr %s411, 128
        %s413 = scalar_lea.vmem [#allocation9], %s412
        // Predicated region
        $region61: #{tpu_custom_call.1} parent=47 // pred_check
          %p414 = pneg %p194
        $region62: #{tpu_custom_call.1} parent=47 // pred_check_branch
          %416 = sbr.rel (%p414) target = $region64
        $region63: #{tpu_custom_call.1} parent=47 // pred_region
          %417 = dma.done %s410, 2048
        $region64: #{tpu_custom_call.1} parent=47 // pred_fallthru
          _
        %p418 = pneg %p64
        %p419 = pneg %p61
        %s420 = sand.u32 %s31, 1
        %s421 = scalar_lea.sflag [#allocation7], %s420
        %s422 = sand.u32 %s77, 1
        %s423 = smul.addr %s422, 128
        %s424 = scalar_lea.vmem [#allocation6], %s423
        %p425 = pneg %p90
        %p426 = pneg %p87
        %p427 = scmp.lt.s32.totalorder %s36, 1
        %s428 = scalar_select %p427, %s36, 1
        %s429 = scalar_lea.vmem %s2, %s428
        %p430 = pneg %p116
        %p431 = pneg %p113
        %s432 = sand.u32 %s31, 1
        %s433 = scalar_lea.sflag [#allocation7], %s432
        %s434 = sand.u32 %s129, 1
        %s435 = smul.addr %s434, 128
        %s436 = scalar_lea.vmem [#allocation8], %s435
        %p437 = pneg %p142
        %p438 = pneg %p139
        %p439 = scmp.lt.s32.totalorder %s36, 1
        %s440 = scalar_select %p439, %s36, 1
        %s441 = scalar_lea.vmem %s4, %s440
        %p442 = pneg %p168
        %p443 = pneg %p165
        %s444 = sand.u32 %s181, 1
        %s445 = scalar_lea.sflag [#allocation10], %s444
        %s446 = sand.u32 %s181, 1
        %s447 = smul.addr %s446, 128
        %s448 = scalar_lea.vmem [#allocation9], %s447
        %p449 = pneg %p194
        %p450 = pneg %p191
        %p451 = pneg %p215
        %p452 = pneg %p212
        %p453 = pneg %p241
        %p454 = pneg %p238
        %p455 = pneg %p269
        %p456 = pneg %p266
        %s457 = sand.u32 %s256, 1
        %s458 = scalar_lea.sflag [#allocation13], %s457
        %s459 = sand.u32 %s256, 1
        %s460 = smul.addr %s459, 16
        %s461 = scalar_lea.vmem [#allocation12], %s460
        %s462 = smul.u32 2, %s35
        %p463 = scmp.lt.s32.totalorder %s36, 1
        %s464 = scalar_select %p463, %s36, 1
        %s465 = scalar_lea.vmem %s2, %s464
        %p466 = scmp.lt.s32.totalorder %s36, 1
        %s467 = scalar_select %p466, %s36, 1
        %s468 = scalar_lea.vmem %s4, %s467
        %s469 = smul.u32 16, %s36
        %s470 = smul.u32 2, %s35
        %s471 = smul.u32 2, %s35
        %v472 = vld [vmem:[#allocation3] sm:$0xff]
        %v473 = vld [vmem:[#allocation3 + $0x8] sm:$0xff]
        %v474 = vld [vmem:[%s395] sm:$0xff]
        %v475 = vld [vmem:[%s395 + $0x8] sm:$0xff]
        %v476 = vld [vmem:[%s395 + $0x10] sm:$0xff]
        %v477 = vld [vmem:[%s395 + $0x18] sm:$0xff]
        %v478 = vld [vmem:[%s395 + $0x20] sm:$0xff]
        %v479 = vld [vmem:[%s395 + $0x28] sm:$0xff]
        %v480 = vld [vmem:[%s395 + $0x30] sm:$0xff]
        %v481 = vld [vmem:[%s395 + $0x38] sm:$0xff]
        %v482 = vld [vmem:[%s395 + $0x40] sm:$0xff]
        %v483 = vld [vmem:[%s395 + $0x48] sm:$0xff]
        %v484 = vld [vmem:[%s395 + $0x50] sm:$0xff]
        %v485 = vld [vmem:[%s395 + $0x58] sm:$0xff]
        %v486 = vld [vmem:[%s395 + $0x60] sm:$0xff]
        %v487 = vld [vmem:[%s395 + $0x68] sm:$0xff]
        %v488 = vld [vmem:[%s395 + $0x70] sm:$0xff]
        %v489 = vld [vmem:[%s395 + $0x78] sm:$0xff]
        %v490 = vld [vmem:[%s465] sm:$0x1]
        %v492 = vlaneseq
        %v493 = vshrl.u32 %v492, 7
        %v494 = vsub.s32 0, %v493
        %v495 = vrot.slane %v490, %v494
        %497 = vmatprep.subr.mxu0 0.0
        %498 = vmatpush1.msra.mxu0 %v474
        %499 = vmatprep.subr.mxu0 0.0
        %500 = vmatpush1.msra.mxu0 %v475
        %501 = vmatprep.subr.mxu0 0.0
        %502 = vmatpush1.msra.mxu0 %v476
        %503 = vmatprep.subr.mxu0 0.0
        %504 = vmatpush1.msra.mxu0 %v477
        %505 = vmatprep.subr.mxu0 0.0
        %506 = vmatpush1.msra.mxu0 %v478
        %507 = vmatprep.subr.mxu0 0.0
        %508 = vmatpush1.msra.mxu0 %v479
        %509 = vmatprep.subr.mxu0 0.0
        %510 = vmatpush1.msra.mxu0 %v480
        %511 = vmatprep.subr.mxu0 0.0
        %512 = vmatpush1.msra.mxu0 %v481
        %513 = vmatprep.subr.mxu0 0.0
        %514 = vmatpush1.msra.mxu0 %v482
        %515 = vmatprep.subr.mxu0 0.0
        %516 = vmatpush1.msra.mxu0 %v483
        %517 = vmatprep.subr.mxu0 0.0
        %518 = vmatpush1.msra.mxu0 %v484
        %519 = vmatprep.subr.mxu0 0.0
        %520 = vmatpush1.msra.mxu0 %v485
        %521 = vmatprep.subr.mxu0 0.0
        %522 = vmatpush1.msra.mxu0 %v486
        %523 = vmatprep.subr.mxu0 0.0
        %524 = vmatpush1.msra.mxu0 %v487
        %525 = vmatprep.subr.mxu0 0.0
        %526 = vmatpush1.msra.mxu0 %v488
        %527 = vmatprep.subr.mxu0 0.0
        %528 = vmatpush1.msra.mxu0 %v489
        %529 = vmatprep.subr.mxu0 0.0
        %530 = vmatpush1.msra.mxu0 0.0
        %531 = vmatprep.subr.mxu0 0.0
        %532 = vmatpush1.msra.mxu0 0.0
        %533 = vmatprep.subr.mxu0 0.0
        %534 = vmatpush1.msra.mxu0 0.0
        %535 = vmatprep.subr.mxu0 0.0
        %536 = vmatpush1.msra.mxu0 0.0
        %537 = vmatprep.subr.mxu0 0.0
        %538 = vmatpush1.msra.mxu0 0.0
        %539 = vmatprep.subr.mxu0 0.0
        %540 = vmatpush1.msra.mxu0 0.0
        %541 = vmatprep.subr.mxu0 0.0
        %542 = vmatpush1.msra.mxu0 0.0
        %543 = vmatprep.subr.mxu0 0.0
        %544 = vmatpush1.msra.mxu0 0.0
        %545 = vmatprep.subr.mxu0 0.0
        %546 = vmatpush1.msra.mxu0 0.0
        %547 = vmatprep.subr.mxu0 0.0
        %548 = vmatpush1.msra.mxu0 0.0
        %549 = vmatprep.subr.mxu0 0.0
        %550 = vmatpush1.msra.mxu0 0.0
        %551 = vmatprep.subr.mxu0 0.0
        %552 = vmatpush1.msra.mxu0 0.0
        %553 = vmatprep.subr.mxu0 0.0
        %554 = vmatpush1.msra.mxu0 0.0
        %555 = vmatprep.subr.mxu0 0.0
        %556 = vmatpush1.msra.mxu0 0.0
        %557 = vmatprep.subr.mxu0 0.0
        %558 = vmatpush1.msra.mxu0 0.0
        %559 = vmatprep.subr.mxu0 0.0
        %560 = vmatpush1.msra.mxu0 0.0
        %561 = vmatprep.mubr.f32.mxu0 0.0
        %562 = vmatmul.mubr.f32.gmra.mrb[0].mxu0 %v472
        %v563 = vpop.f32.mrb[0].mxu0
        %v564 = vadd.f32 %v495, %v563
        %v565 = vpop.f32.mrb[0].mxu0
        %566 = vmatprep.mubr.f32.mxu0 0.0
        %567 = vmatmul.mubr.f32.gmra.mrb[0].mxu0 %v473
        %v568 = vpop.f32.mrb[0].mxu0
        %v569 = vadd.f32 %v495, %v568
        %v570 = vpop.f32.mrb[0].mxu0
        %571 = vdwg.mxu0
        %v572 = vld [vmem:[%s404] sm:$0xff]
        %v573 = vld [vmem:[%s404 + $0x8] sm:$0xff]
        %v574 = vld [vmem:[%s404 + $0x10] sm:$0xff]
        %v575 = vld [vmem:[%s404 + $0x18] sm:$0xff]
        %v576 = vld [vmem:[%s404 + $0x20] sm:$0xff]
        %v577 = vld [vmem:[%s404 + $0x28] sm:$0xff]
        %v578 = vld [vmem:[%s404 + $0x30] sm:$0xff]
        %v579 = vld [vmem:[%s404 + $0x38] sm:$0xff]
        %v580 = vld [vmem:[%s404 + $0x40] sm:$0xff]
        %v581 = vld [vmem:[%s404 + $0x48] sm:$0xff]
        %v582 = vld [vmem:[%s404 + $0x50] sm:$0xff]
        %v583 = vld [vmem:[%s404 + $0x58] sm:$0xff]
        %v584 = vld [vmem:[%s404 + $0x60] sm:$0xff]
        %v585 = vld [vmem:[%s404 + $0x68] sm:$0xff]
        %v586 = vld [vmem:[%s404 + $0x70] sm:$0xff]
        %v587 = vld [vmem:[%s404 + $0x78] sm:$0xff]
        %v588 = vld [vmem:[%s468] sm:$0x1]
        %v590 = vlaneseq
        %v591 = vshrl.u32 %v590, 7
        %v592 = vsub.s32 0, %v591
        %v593 = vrot.slane %v588, %v592
        %595 = vmatprep.subr.mxu0 0.0
        %596 = vmatpush1.msra.mxu0 %v572
        %597 = vmatprep.subr.mxu0 0.0
        %598 = vmatpush1.msra.mxu0 %v573
        %599 = vmatprep.subr.mxu0 0.0
        %600 = vmatpush1.msra.mxu0 %v574
        %601 = vmatprep.subr.mxu0 0.0
        %602 = vmatpush1.msra.mxu0 %v575
        %603 = vmatprep.subr.mxu0 0.0
        %604 = vmatpush1.msra.mxu0 %v576
        %605 = vmatprep.subr.mxu0 0.0
        %606 = vmatpush1.msra.mxu0 %v577
        %607 = vmatprep.subr.mxu0 0.0
        %608 = vmatpush1.msra.mxu0 %v578
        %609 = vmatprep.subr.mxu0 0.0
        %610 = vmatpush1.msra.mxu0 %v579
        %611 = vmatprep.subr.mxu0 0.0
        %612 = vmatpush1.msra.mxu0 %v580
        %613 = vmatprep.subr.mxu0 0.0
        %614 = vmatpush1.msra.mxu0 %v581
        %615 = vmatprep.subr.mxu0 0.0
        %616 = vmatpush1.msra.mxu0 %v582
        %617 = vmatprep.subr.mxu0 0.0
        %618 = vmatpush1.msra.mxu0 %v583
        %619 = vmatprep.subr.mxu0 0.0
        %620 = vmatpush1.msra.mxu0 %v584
        %621 = vmatprep.subr.mxu0 0.0
        %622 = vmatpush1.msra.mxu0 %v585
        %623 = vmatprep.subr.mxu0 0.0
        %624 = vmatpush1.msra.mxu0 %v586
        %625 = vmatprep.subr.mxu0 0.0
        %626 = vmatpush1.msra.mxu0 %v587
        %627 = vmatprep.subr.mxu0 0.0
        %628 = vmatpush1.msra.mxu0 0.0
        %629 = vmatprep.subr.mxu0 0.0
        %630 = vmatpush1.msra.mxu0 0.0
        %631 = vmatprep.subr.mxu0 0.0
        %632 = vmatpush1.msra.mxu0 0.0
        %633 = vmatprep.subr.mxu0 0.0
        %634 = vmatpush1.msra.mxu0 0.0
        %635 = vmatprep.subr.mxu0 0.0
        %636 = vmatpush1.msra.mxu0 0.0
        %637 = vmatprep.subr.mxu0 0.0
        %638 = vmatpush1.msra.mxu0 0.0
        %639 = vmatprep.subr.mxu0 0.0
        %640 = vmatpush1.msra.mxu0 0.0
        %641 = vmatprep.subr.mxu0 0.0
        %642 = vmatpush1.msra.mxu0 0.0
        %643 = vmatprep.subr.mxu0 0.0
        %644 = vmatpush1.msra.mxu0 0.0
        %645 = vmatprep.subr.mxu0 0.0
        %646 = vmatpush1.msra.mxu0 0.0
        %647 = vmatprep.subr.mxu0 0.0
        %648 = vmatpush1.msra.mxu0 0.0
        %649 = vmatprep.subr.mxu0 0.0
        %650 = vmatpush1.msra.mxu0 0.0
        %651 = vmatprep.subr.mxu0 0.0
        %652 = vmatpush1.msra.mxu0 0.0
        %653 = vmatprep.subr.mxu0 0.0
        %654 = vmatpush1.msra.mxu0 0.0
        %655 = vmatprep.subr.mxu0 0.0
        %656 = vmatpush1.msra.mxu0 0.0
        %657 = vmatprep.subr.mxu0 0.0
        %658 = vmatpush1.msra.mxu0 0.0
        %659 = vmatprep.mubr.f32.mxu0 0.0
        %660 = vmatmul.mubr.f32.gmra.mrb[0].mxu0 %v472
        %v661 = vpop.f32.mrb[0].mxu0
        %v662 = vadd.f32 %v593, %v661
        %v663 = vpop.f32.mrb[0].mxu0
        %664 = vmatprep.mubr.f32.mxu0 0.0
        %665 = vmatmul.mubr.f32.gmra.mrb[0].mxu0 %v473
        %v666 = vpop.f32.mrb[0].mxu0
        %v667 = vadd.f32 %v593, %v666
        %v668 = vpop.f32.mrb[0].mxu0
        %669 = vdwg.mxu0
        %v670 = vxor.u32 %v564, 2147483648
        %v671 = vxor.u32 %v569, 2147483648
        %v672 = vmul.f32 %v670, 1.442695
        %v673 = vpow.pop %v672
        %v674 = vmul.f32 %v671, 1.442695
        %v675 = vpow.pop %v674
        %v676 = vadd.f32 %v673, 1.0
        %v677 = vadd.f32 %v675, 1.0
        %v678 = vrcp.pop %v676
        %v679 = vmul.f32 1.0, %v678
        %v680 = vrcp.pop %v677
        %v681 = vmul.f32 1.0, %v680
        %v682 = vmul.f32 %v564, %v679
        %v683 = vmul.f32 %v569, %v681
        %v684 = vmul.f32 %v682, %v662
        %v685 = vmul.f32 %v683, %v667
        %686 = vst [vmem:[%s461] sm:$0xff] %v684
        %687 = vst [vmem:[%s461 + $0x8] sm:$0xff] %v685
        %v688 = vld [vmem:[%s413] sm:$0xff]
        %v689 = vld [vmem:[%s413 + $0x8] sm:$0xff]
        %v690 = vld [vmem:[%s413 + $0x10] sm:$0xff]
        %v691 = vld [vmem:[%s413 + $0x18] sm:$0xff]
        %v692 = vld [vmem:[%s413 + $0x20] sm:$0xff]
        %v693 = vld [vmem:[%s413 + $0x28] sm:$0xff]
        %v694 = vld [vmem:[%s413 + $0x30] sm:$0xff]
        %v695 = vld [vmem:[%s413 + $0x38] sm:$0xff]
        %v696 = vld [vmem:[%s413 + $0x40] sm:$0xff]
        %v697 = vld [vmem:[%s413 + $0x48] sm:$0xff]
        %v698 = vld [vmem:[%s413 + $0x50] sm:$0xff]
        %v699 = vld [vmem:[%s413 + $0x58] sm:$0xff]
        %v700 = vld [vmem:[%s413 + $0x60] sm:$0xff]
        %v701 = vld [vmem:[%s413 + $0x68] sm:$0xff]
        %v702 = vld [vmem:[%s413 + $0x70] sm:$0xff]
        %v703 = vld [vmem:[%s413 + $0x78] sm:$0xff]
        %704 = vmatprep.subr.mxu0 0.0
        %705 = vmatpush1.msra.mxu0 %v688
        %706 = vmatprep.subr.mxu0 0.0
        %707 = vmatpush1.msra.mxu0 %v689
        %708 = vmatprep.subr.mxu0 0.0
        %709 = vmatpush1.msra.mxu0 %v690
        %710 = vmatprep.subr.mxu0 0.0
        %711 = vmatpush1.msra.mxu0 %v691
        %712 = vmatprep.subr.mxu0 0.0
        %713 = vmatpush1.msra.mxu0 %v692
        %714 = vmatprep.subr.mxu0 0.0
        %715 = vmatpush1.msra.mxu0 %v693
        %716 = vmatprep.subr.mxu0 0.0
        %717 = vmatpush1.msra.mxu0 %v694
        %718 = vmatprep.subr.mxu0 0.0
        %719 = vmatpush1.msra.mxu0 %v695
        %720 = vmatprep.subr.mxu0 0.0
        %721 = vmatpush1.msra.mxu0 %v696
        %722 = vmatprep.subr.mxu0 0.0
        %723 = vmatpush1.msra.mxu0 %v697
        %724 = vmatprep.subr.mxu0 0.0
        %725 = vmatpush1.msra.mxu0 %v698
        %726 = vmatprep.subr.mxu0 0.0
        %727 = vmatpush1.msra.mxu0 %v699
        %728 = vmatprep.subr.mxu0 0.0
        %729 = vmatpush1.msra.mxu0 %v700
        %730 = vmatprep.subr.mxu0 0.0
        %731 = vmatpush1.msra.mxu0 %v701
        %732 = vmatprep.subr.mxu0 0.0
        %733 = vmatpush1.msra.mxu0 %v702
        %734 = vmatprep.subr.mxu0 0.0
        %735 = vmatpush1.msra.mxu0 %v703
        %736 = vmatprep.subr.mxu0 0.0
        %737 = vmatpush1.msra.mxu0 0.0
        %738 = vmatprep.subr.mxu0 0.0
        %739 = vmatpush1.msra.mxu0 0.0
        %740 = vmatprep.subr.mxu0 0.0
        %741 = vmatpush1.msra.mxu0 0.0
        %742 = vmatprep.subr.mxu0 0.0
        %743 = vmatpush1.msra.mxu0 0.0
        %744 = vmatprep.subr.mxu0 0.0
        %745 = vmatpush1.msra.mxu0 0.0
        %746 = vmatprep.subr.mxu0 0.0
        %747 = vmatpush1.msra.mxu0 0.0
        %748 = vmatprep.subr.mxu0 0.0
        %749 = vmatpush1.msra.mxu0 0.0
        %750 = vmatprep.subr.mxu0 0.0
        %751 = vmatpush1.msra.mxu0 0.0
        %752 = vmatprep.subr.mxu0 0.0
        %753 = vmatpush1.msra.mxu0 0.0
        %754 = vmatprep.subr.mxu0 0.0
        %755 = vmatpush1.msra.mxu0 0.0
        %756 = vmatprep.subr.mxu0 0.0
        %757 = vmatpush1.msra.mxu0 0.0
        %758 = vmatprep.subr.mxu0 0.0
        %759 = vmatpush1.msra.mxu0 0.0
        %760 = vmatprep.subr.mxu0 0.0
        %761 = vmatpush1.msra.mxu0 0.0
        %762 = vmatprep.subr.mxu0 0.0
        %763 = vmatpush1.msra.mxu0 0.0
        %764 = vmatprep.subr.mxu0 0.0
        %765 = vmatpush1.msra.mxu0 0.0
        %766 = vmatprep.subr.mxu0 0.0
        %767 = vmatpush1.msra.mxu0 0.0
        %768 = vmatprep.mubr.f32.mxu0 0.0
        %769 = vmatmul.mubr.f32.gmra.mrb[0].mxu0 %v684
        %v770 = vpop.f32.mrb[0].mxu0
        %v771 = vadd.f32 0.0, %v770
        %v772 = vpop.f32.mrb[0].mxu0
        %773 = vmatprep.mubr.f32.mxu0 0.0
        %774 = vmatmul.mubr.f32.gmra.mrb[0].mxu0 %v685
        %v775 = vpop.f32.mrb[0].mxu0
        %v776 = vadd.f32 0.0, %v775
        %v777 = vpop.f32.mrb[0].mxu0
        %778 = vdwg.mxu0
        %p779 = scmp.eq.s32.totalorder %s36, 0
        // Predicated region
        $region65: #{tpu_custom_call.1} parent=47 // pred_check
          %p780 = pneg %p779
        $region66: #{tpu_custom_call.1} parent=47 // pred_check_branch
          %782 = sbr.rel (%p780) target = $region68
        $region67: #{tpu_custom_call.1} parent=47 // pred_region
          %783 = vst [vmem:[#allocation2] sm:$0xff] %v771
          %784 = vst [vmem:[#allocation2 + $0x8] sm:$0xff] %v776
        $region68: #{tpu_custom_call.1} parent=47 // pred_fallthru
          _
        %p785 = scmp.ne.s32.totalorder %s36, 0
        // Predicated region
        $region69: #{tpu_custom_call.1} parent=47 // pred_check
          %p786 = pneg %p785
        $region70: #{tpu_custom_call.1} parent=47 // pred_check_branch
          %788 = sbr.rel (%p786) target = $region72
        $region71: #{tpu_custom_call.1} parent=47 // pred_region
          %v789 = vld [vmem:[#allocation2] sm:$0xff]
          %v790 = vld [vmem:[#allocation2 + $0x8] sm:$0xff]
          %v791 = vadd.f32 %v789, %v771
          %v792 = vadd.f32 %v790, %v776
          %793 = vst [vmem:[#allocation2] sm:$0xff] %v791
          %794 = vst [vmem:[#allocation2 + $0x8] sm:$0xff] %v792
        $region72: #{tpu_custom_call.1} parent=47 // pred_fallthru
          _
        %p795 = scmp.eq.s32.totalorder %s36, 1
        // Predicated region
        $region73: #{tpu_custom_call.1} parent=47 // pred_check
          %p796 = pneg %p795
        $region74: #{tpu_custom_call.1} parent=47 // pred_check_branch
          %798 = sbr.rel (%p796) target = $region76
        $region75: #{tpu_custom_call.1} parent=47 // pred_region
          %v799 = vld [vmem:[#allocation2] sm:$0xff]
          %v800 = vld [vmem:[#allocation2 + $0x8] sm:$0xff]
          %v801 = vld [vmem:[%s6] sm:$0x1]
          %v803 = vlaneseq
          %v804 = vshrl.u32 %v803, 7
          %v805 = vsub.s32 0, %v804
          %v806 = vrot.slane %v801, %v805
          %v808 = vadd.f32 %v799, %v806
          %v809 = vadd.f32 %v800, %v806
          %810 = vst [vmem:[#allocation11] sm:$0xff] %v808
          %811 = vst [vmem:[#allocation11 + $0x8] sm:$0xff] %v809
        $region76: #{tpu_custom_call.1} parent=47 // pred_fallthru
          _
        %s812 = sand.u32 %s256, 1
        %s813 = scalar_lea.sflag [#allocation13], %s812
        %s814 = sand.u32 %s256, 1
        %s815 = smul.addr %s814, 16
        %s816 = scalar_lea.vmem [#allocation12], %s815
        // Predicated region
        $region77: #{tpu_custom_call.1} parent=47 // pred_check
          %p817 = pneg %p238
        $region78: #{tpu_custom_call.1} parent=47 // pred_check_branch
          %819 = sbr.rel (%p817) target = $region80
        $region79: #{tpu_custom_call.1} parent=47 // pred_region
          %s820 = smul.u32 2, %s35
          %s822 = ssub.s32 256, 256
          %823 = vsyncadd [#allocation5], %s822
          %s824 = smul.addr %s820, 128
          %s825 = scalar_lea.hbm %s7, %s824
          %s826 = sshll.u32 [#allocation11], 4
          %s827 = int_to_ptr.vmem [resolvable:$true] %s826
          %832 = dma.vmem_to_hbm [thread:$0]  %s827, 256, %s825, [#allocation5], 128, 128, 8
        $region80: #{tpu_custom_call.1} parent=47 // pred_fallthru
          _
        // Predicated region
        $region81: #{tpu_custom_call.1} parent=47 // pred_check
          %p833 = pneg %p266
        $region82: #{tpu_custom_call.1} parent=47 // pred_check_branch
          %835 = sbr.rel (%p833) target = $region84
        $region83: #{tpu_custom_call.1} parent=47 // pred_region
          %s836 = smul.u32 2, %s35
          %s838 = ssub.s32 256, 256
          %839 = vsyncadd %s813, %s838
          %s840 = smul.addr %s836, 2
          %s841 = sadd.s32 %s36, %s840
          %s842 = smul.addr %s841, 128
          %s843 = scalar_lea.hbm %s8, %s842
          %s844 = sshll.u32 %s816, 4
          %s845 = int_to_ptr.vmem [resolvable:$true] %s844
          %850 = dma.vmem_to_hbm [thread:$0]  %s845, 256, %s843, %s813, 128, 256, 8
        $region84: #{tpu_custom_call.1} parent=47 // pred_fallthru
          _
        // Predicated region
        $region85: #{tpu_custom_call.1} parent=47 // pred_check
          %p851 = pneg %p238
        $region86: #{tpu_custom_call.1} parent=47 // pred_check_branch
          %853 = sbr.rel (%p851) target = $region88
        $region87: #{tpu_custom_call.1} parent=47 // pred_region
          %854 = dma.done [#allocation5], 256
        $region88: #{tpu_custom_call.1} parent=47 // pred_fallthru
          _
      $region48: #{tpu_custom_call.1} parent=5 // pred_fallthru
        _
      %p855 = scmp.le.s32.totalorder 2, %s26
      // Predicated region
      $region89: #{tpu_custom_call.1} parent=5 // pred_check
        %p856 = pneg %p855
      $region90: #{tpu_custom_call.1} parent=5 // pred_check_branch
        %858 = sbr.rel (%p856) target = $region92
      $region91: #{tpu_custom_call.1} parent=5 // pred_region
        %s859 = ssub.s32 %s26, 2
        // Predicated region
        $region93: #{tpu_custom_call.1} parent=91 // pred_check
          %p860 = pneg %p272
        $region94: #{tpu_custom_call.1} parent=91 // pred_check_branch
          %862 = sbr.rel (%p860) target = $region96
        $region95: #{tpu_custom_call.1} parent=91 // pred_region
          %s863 = sand.u32 %s257, 1
          %s864 = scalar_lea.sflag [#allocation13], %s863
          %s865 = sand.u32 %s257, 1
          %s866 = smul.addr %s865, 16
          %s867 = scalar_lea.vmem [#allocation12], %s866
          %868 = dma.done %s864, 256
        $region96: #{tpu_custom_call.1} parent=91 // pred_fallthru
          _
      $region92: #{tpu_custom_call.1} parent=5 // pred_fallthru
        _
    $region6: #{tpu_custom_call.1} parent=1 // loop_footer
      %s30 = sadd.s32 1, %s26
    $region7: #{tpu_custom_call.1} parent=1 // loop_footer_branch
      %25 = sbr.rel target = $region3
    $region8: #{tpu_custom_call.1} parent=1 // loop_exit
      _
    %869 = vsyncpa [#allocation4], 1
    %s870 = scalar_lea.sflag [#allocation4], 1
    %871 = vsyncpa %s870, 1
    %872 = vsyncpa [#allocation7], 1
    %s873 = scalar_lea.sflag [#allocation7], 1
    %874 = vsyncpa %s873, 1
    %875 = vsyncpa [#allocation10], 1
    %s876 = scalar_lea.sflag [#allocation10], 1
    %877 = vsyncpa %s876, 1
    %878 = vsyncpa [#allocation5], 1
    %s879 = scalar_lea.sflag [#allocation5], 1
    %880 = vsyncpa %s879, 1
    %881 = vsyncpa [#allocation13], 1
    %s882 = scalar_lea.sflag [#allocation13], 1
    %883 = vsyncpa %s882, 1

</llo_original>
